<compile_context>
chip_gen: v5e
topology: v5e:2x2
jax: 0.10.0
libtpu: 0.0.40
codegen_flags: <defaults>
</compile_context>

<pallas_src>
import functools
import math

import jax
import jax.numpy as jnp
from jax.experimental import pallas as pl
from jax.experimental.pallas import tpu as pltpu


def _mat_gru_cell_kernel(nu_ref, x_ref, wstack_ref, uh_ref, bstack_ref,
                         out_ref, *, emb_dim):
    """One column tile of the mat_GRU_cell forward.

    nu_ref:     (1,)     SMEM scalar: num_users (user/item bias boundary)
    x_ref:      (D, TN)  previous hidden state tile (x == prev_hidden here)
    wstack_ref: (3D, D)  rows = [W_u + U_u; W_r + U_r; W_h]
    uh_ref:     (D, D)   U of the htilda gate (applied to reset * hidden)
    bstack_ref: (3D, 2)  cols = [user_b, item_b - user_b], rows = [b_u; b_r; b_h]
    out_ref:    (D, TN)  new hidden state tile (dtype follows hidden stream)
    """
    D = emb_dim
    tn = x_ref.shape[-1]

    x = x_ref[...]                      # f32 or bf16
    x_f32 = x.astype(jnp.float32)

    # One fused MXU push for the three matmuls that share x
    # (hidden == x in this cell, so W_u@x + U_u@x == (W_u+U_u)@x, etc.):
    #   rows [0:D)   = (W_u+U_u) @ x
    #   rows [D:2D)  = (W_r+U_r) @ x
    #   rows [2D:3D) = W_h @ x
    z = jnp.dot(wstack_ref[...], x, preferred_element_type=jnp.float32)

    # Segment bias: user_b for global columns < num_users, item_b otherwise.
    # Stored as [user_b, item_b - user_b] so the select becomes a broadcast
    # FMA applied per gate at its use site (no (3D, TN) temp kept live).
    num_users = nu_ref[0]
    col0 = pl.program_id(0) * tn
    col = col0 + jax.lax.broadcasted_iota(jnp.int32, (1, tn), 1)
    is_item = (col >= num_users).astype(jnp.float32)            # (1, TN)
    b = bstack_ref[...].astype(jnp.float32)                     # (3D, 2)

    def gate_bias(g):
        base = b[g * D:(g + 1) * D, 0:1]                        # (D, 1)
        delta = b[g * D:(g + 1) * D, 1:2]                       # (D, 1)
        return base + is_item * delta                           # (D, TN)

    upd = jax.nn.sigmoid(z[0:D] + gate_bias(0))
    rst = jax.nn.sigmoid(z[D:2 * D] + gate_bias(1))

    # Keep the U_h matmul in the streamed weight dtype (single-pass bf16 MXU
    # on the bf16 path); all elementwise/transcendental math stays in f32.
    h_in = (rst * x_f32).astype(uh_ref.dtype)
    h_cap = jnp.tanh(
        z[2 * D:3 * D]
        + jnp.dot(uh_ref[...], h_in, preferred_element_type=jnp.float32)
        + gate_bias(2))

    # (1 - u) * x + u * h  ==  x + u * (h - x)
    out_ref[...] = (x_f32 + upd * (h_cap - x_f32)).astype(out_ref.dtype)


def _default_vmem_budget():
    """~3/4 of physical VMEM (96 MiB cap); conservative 48 MiB fallback
    (v7x TensorCores only have 64 MiB of VMEM each)."""
    try:
        cap = int(pltpu.get_tpu_info().vmem_capacity_bytes)
    except Exception:
        cap = 64 << 20
    return min(cap * 3 // 4, 96 << 20)


def _pick_tile_n(n, emb_dim, *, in_itemsize, out_itemsize, weight_bytes,
                 vmem_budget_bytes, max_tile=8192):
    """Largest lane-dense (multiple of 128) tile that divides N, fits the
    VMEM budget, and leaves >= 4 grid steps (>= 2 per TensorCore on v7x)
    when N allows it."""
    assert n % 128 == 0, "node axis must be a multiple of 128"
    D = emb_dim
    # Per-column VMEM bytes while a tile is live:
    #   double-buffered input + double-buffered output
    #   + z (3D rows, f32) + ~4 D-row f32 temporaries (bias / upd / rst / h_cap)
    per_col = (2 * D * in_itemsize + 2 * D * out_itemsize
               + 3 * D * 4 + 4 * D * 4)
    # Weights are single-buffered whole-array VMEM residents; keep 1 MiB slack.
    budget = max(vmem_budget_bytes - weight_bytes - (1 << 20), per_col * 128)
    fit_cap = max(128, (budget // per_col) // 128 * 128)
    if n >= 4 * 128:
        step_cap = n // 4          # >= 2 steps per TensorCore on v7x
    elif n >= 2 * 128:
        step_cap = n // 2
    else:
        step_cap = n
    limit = max(128, min(max_tile, fit_cap, step_cap))
    best, cand = 128, 128
    while cand <= limit:
        if n % cand == 0:
            best = cand
        cand += 128
    return best


def mat_gru_cell(prev_hidden, params, num_users, *, tile_n=None,
                 out_dtype=None, vmem_budget_bytes=None):
    """prev_hidden: (D, N).  params: {"W_stack": (3D,D), "U_h": (D,D),
    "B_stack": (3D,2)}.  Returns the new hidden state, same dtype as
    prev_hidden unless out_dtype is given."""
    D, N = prev_hidden.shape
    # Sublane-aligned row slices (z[0:D], z[D:2D], ...) and stacked-W tiling.
    assert D % 8 == 0, "emb_dim must be a multiple of 8"

    w_stack, u_h, b_stack = params["W_stack"], params["U_h"], params["B_stack"]
    assert w_stack.shape == (3 * D, D)
    assert u_h.shape == (D, D)
    assert b_stack.shape == (3 * D, 2)

    if out_dtype is None:
        out_dtype = prev_hidden.dtype
    out_dtype = jnp.dtype(out_dtype)

    nbytes = lambda a: a.size * a.dtype.itemsize
    weight_bytes = nbytes(w_stack) + nbytes(u_h) + nbytes(b_stack)

    if vmem_budget_bytes is None:
        vmem_budget_bytes = _default_vmem_budget()
    if tile_n is None:
        tile_n = _pick_tile_n(
            N, D,
            in_itemsize=prev_hidden.dtype.itemsize,
            out_itemsize=out_dtype.itemsize,
            weight_bytes=weight_bytes,
            vmem_budget_bytes=vmem_budget_bytes)
    assert N % tile_n == 0 and tile_n % 128 == 0

    # Column tiles: pipelined / double-buffered by BlockSpec.
    col_spec = pl.BlockSpec((D, tile_n), lambda j, nu: (0, j))
    # Grid-invariant weights/biases: whole array resident in VMEM, single
    # copy, no per-step DMA and no double-buffer allocation.
    vmem_full = pl.BlockSpec(memory_space=pltpu.MemorySpace.VMEM)

    kernel = functools.partial(_mat_gru_cell_kernel, emb_dim=D)

    cost = pl.CostEstimate(
        flops=2 * 4 * D * D * N,                 # 3 fused + 1 data-dependent
        transcendentals=3 * D * N,               # 2 sigmoids + 1 tanh
        bytes_accessed=int(nbytes(prev_hidden) + weight_bytes
                           + D * N * out_dtype.itemsize),
    )

    num_users_arr = jnp.asarray([num_users], dtype=jnp.int32)

    # TODO(synk): in a recurrent scan with matching in/out dtypes, donate the
    # hidden buffer via input_output_aliases; on v7x, evaluate
    # pltpu.CORE_PARALLEL for the column axis and verify both TCs get tiles.
    return pl.pallas_call(
        kernel,
        out_shape=jax.ShapeDtypeStruct((D, N), out_dtype),
        grid_spec=pltpu.PrefetchScalarGridSpec(
            num_scalar_prefetch=1,
            grid=(N // tile_n,),
            in_specs=[col_spec, vmem_full, vmem_full, vmem_full],
            out_specs=col_spec,
        ),
        compiler_params=pltpu.CompilerParams(
            dimension_semantics=("parallel",),
            vmem_limit_bytes=int(vmem_budget_bytes),
        ),
        cost_estimate=cost,
    )(num_users_arr, prev_hidden, w_stack, u_h, b_stack)


# ---------------------------------------------------------------------------
# Parameters (deterministic, xavier_uniform as in the PyTorch module) + packing
# ---------------------------------------------------------------------------
def xavier_uniform(key, shape):
    fan_out, fan_in = shape  # torch: fan_in = cols, fan_out = rows for 2-D
    bound = math.sqrt(6.0 / (fan_in + fan_out))
    return jax.random.uniform(key, shape, jnp.float32, -bound, bound)


def make_raw_params(key, emb_dim):
    """Per-gate parameters exactly as in the PyTorch module (f32)."""
    raw = {}
    for name, k in zip(("update", "reset", "htilda"), jax.random.split(key, 3)):
        kW, kU, kub, kib = jax.random.split(k, 4)
        raw[name] = dict(
            W=xavier_uniform(kW, (emb_dim, emb_dim)),
            U=xavier_uniform(kU, (emb_dim, emb_dim)),
            user_b=xavier_uniform(kub, (emb_dim, 1)),
            item_b=xavier_uniform(kib, (emb_dim, 1)),
        )
    return raw


def pack_params(raw, compute_dtype=jnp.float32):
    """Pack the per-gate params into the fused-kernel layout.

    Exploits hidden == x in mat_GRU_cell.forward: update/reset gates use the
    pre-summed (W + U); only the htilda gate keeps U separate (it multiplies
    reset * hidden).  Biases are stored as [user_b, item_b - user_b].
    """
    upd, rst, hti = raw["update"], raw["reset"], raw["htilda"]
    w_stack = jnp.concatenate(
        [upd["W"] + upd["U"], rst["W"] + rst["U"], hti["W"]], axis=0)
    b_stack = jnp.concatenate(
        [jnp.concatenate([g["user_b"], g["item_b"] - g["user_b"]], axis=1)
         for g in (upd, rst, hti)], axis=0)
    return {
        "W_stack": w_stack.astype(compute_dtype),
        "U_h": hti["U"].astype(compute_dtype),
        "B_stack": b_stack.astype(jnp.float32),
    }


def mat_gru_cell_ref(prev_hidden, raw, num_users):
    """Pure-JAX f32 reference matching the PyTorch forward semantics."""
    N = prev_hidden.shape[1]
    num_items = N - num_users

    def gate(p, act, x, hidden):
        bias = jnp.concatenate([jnp.tile(p["user_b"], (1, num_users)),
                                jnp.tile(p["item_b"], (1, num_items))], axis=1)
        return act(p["W"] @ x + p["U"] @ hidden + bias)

    x = prev_hidden
    upd = gate(raw["update"], jax.nn.sigmoid, x, x)
    rst = gate(raw["reset"], jax.nn.sigmoid, x, x)
    h_cap = gate(raw["htilda"], jnp.tanh, x, rst * prev_hidden)
    return (1.0 - upd) * prev_hidden + upd * h_cap


if __name__ == "__main__":
    emb_dim = 32
    num_users = 100          # not a multiple of 128 -> exercises the in-tile
    num_items = 156          # user/item bias boundary select
    N = num_users + num_items  # 256 -> two lane-dense 128-column tiles

    root = jax.random.PRNGKey(0)
    k_params, k_hidden = jax.random.split(root)
    raw = make_raw_params(k_params, emb_dim)
    prev_hidden = jax.random.normal(k_hidden, (emb_dim, N), jnp.float32)

    ref = mat_gru_cell_ref(prev_hidden, raw, num_users)

    # 1) f32 path: f32 weights + f32 hidden stream + f32 output.
    params_f32 = pack_params(raw, compute_dtype=jnp.float32)
    out_f32 = jax.block_until_ready(
        mat_gru_cell(prev_hidden, params_f32, num_users))
    assert out_f32.shape == (emb_dim, N) and out_f32.dtype == jnp.float32
    err_f32 = float(jnp.max(jnp.abs(out_f32 - ref)))
    assert err_f32 < 5e-5, err_f32

    # 2) Bandwidth-optimized path: bf16 weights + bf16 hidden stream + bf16
    #    output (f32 accumulation + elementwise math inside the kernel).
    params_bf16 = pack_params(raw, compute_dtype=jnp.bfloat16)
    out_bf16 = jax.block_until_ready(
        mat_gru_cell(prev_hidden.astype(jnp.bfloat16), params_bf16, num_users))
    assert out_bf16.shape == (emb_dim, N) and out_bf16.dtype == jnp.bfloat16
    err_bf16 = float(jnp.max(jnp.abs(out_bf16.astype(jnp.float32) - ref)))
    assert err_bf16 < 1e-1, err_bf16

    print("KERNEL_OK")
</pallas_src>

<mosaic_0001>
module attributes {stable_mosaic.version = 11 : i64} {
  func.func @_mat_gru_cell_kernel(%arg0: i32, %arg1: memref<1xi32, #tpu.memory_space<smem>>, %arg2: memref<32x128xf32, #tpu.memory_space<vmem>>, %arg3: memref<96x32xf32, #tpu.memory_space<vmem>>, %arg4: memref<32x32xf32, #tpu.memory_space<vmem>>, %arg5: memref<96x2xf32, #tpu.memory_space<vmem>>, %arg6: memref<32x128xf32, #tpu.memory_space<vmem>>) attributes {dimension_semantics = [#tpu.dimension_semantics<parallel>], iteration_bounds = array<i64: 2>, scalar_prefetch = 1 : i64, scratch_operands = 0 : i64, tpu.core_type = #tpu.core_type<tc>, window_params = [{transform_indices = @transform_0, window_bounds = array<i64: 32, 128>}, {pipeline_mode = #tpu.pipeline_mode<synchronous>, transform_indices = @transform_1, window_bounds = array<i64: 96, 32>}, {pipeline_mode = #tpu.pipeline_mode<synchronous>, transform_indices = @transform_2, window_bounds = array<i64: 32, 32>}, {pipeline_mode = #tpu.pipeline_mode<synchronous>, transform_indices = @transform_3, window_bounds = array<i64: 96, 2>}, {transform_indices = @transform_4, window_bounds = array<i64: 32, 128>}]} {
    %c0 = arith.constant 0 : index
    %c0_0 = arith.constant 0 : index
    %0 = vector.load %arg2[%c0, %c0_0] : memref<32x128xf32, #tpu.memory_space<vmem>>, vector<32x128xf32>
    %c0_1 = arith.constant 0 : index
    %c0_2 = arith.constant 0 : index
    %1 = vector.load %arg3[%c0_1, %c0_2] : memref<96x32xf32, #tpu.memory_space<vmem>>, vector<96x32xf32>
    %cst = arith.constant dense<0.000000e+00> : vector<96x128xf32>
    %2 = tpu.matmul %1, %0, %cst {dimension_numbers = #tpu.dot_dimension_numbers<[1], [0], [0], [1], [0, 0, 1, 1], [], []>} : vector<96x32xf32>, vector<32x128xf32>, vector<96x128xf32> -> vector<96x128xf32>
    %c0_3 = arith.constant 0 : index
    %3 = memref.load %arg1[%c0_3] : memref<1xi32, #tpu.memory_space<smem>>
    %c128_i32 = arith.constant 128 : i32
    %4 = arith.muli %arg0, %c128_i32 : i32
    %5 = tpu.iota {dimensions = array<i32: 1>} : vector<1x128xi32>
    %6 = vector.broadcast %4 : i32 to vector<1x128xi32>
    %7 = arith.addi %6, %5 : vector<1x128xi32>
    %8 = vector.broadcast %3 : i32 to vector<1x128xi32>
    %9 = arith.cmpi sge, %7, %8 : vector<1x128xi32>
    %10 = arith.extui %9 : vector<1x128xi1> to vector<1x128xi32>
    %11 = arith.sitofp %10 : vector<1x128xi32> to vector<1x128xf32>
    %c0_4 = arith.constant 0 : index
    %c0_5 = arith.constant 0 : index
    %12 = vector.load %arg5[%c0_4, %c0_5] : memref<96x2xf32, #tpu.memory_space<vmem>>, vector<96x2xf32>
    %13 = vector.extract_strided_slice %2 {offsets = [0, 0], sizes = [32, 128], strides = [1, 1]} : vector<96x128xf32> to vector<32x128xf32>
    %14 = vector.extract_strided_slice %12 {offsets = [0, 0], sizes = [32, 1], strides = [1, 1]} : vector<96x2xf32> to vector<32x1xf32>
    %15 = vector.extract_strided_slice %12 {offsets = [0, 1], sizes = [32, 1], strides = [1, 1]} : vector<96x2xf32> to vector<32x1xf32>
    %16 = vector.broadcast %11 : vector<1x128xf32> to vector<32x128xf32>
    %17 = vector.broadcast %15 : vector<32x1xf32> to vector<32x128xf32>
    %18 = arith.mulf %16, %17 : vector<32x128xf32>
    %19 = vector.broadcast %14 : vector<32x1xf32> to vector<32x128xf32>
    %20 = arith.addf %19, %18 : vector<32x128xf32>
    %21 = arith.addf %13, %20 : vector<32x128xf32>
    %22 = arith.negf %21 : vector<32x128xf32>
    %23 = math.exp %22 : vector<32x128xf32>
    %cst_6 = arith.constant 1.000000e+00 : f32
    %24 = vector.broadcast %cst_6 : f32 to vector<32x128xf32>
    %25 = arith.addf %24, %23 : vector<32x128xf32>
    %26 = arith.divf %24, %25 : vector<32x128xf32>
    %27 = vector.extract_strided_slice %2 {offsets = [32, 0], sizes = [32, 128], strides = [1, 1]} : vector<96x128xf32> to vector<32x128xf32>
    %28 = vector.extract_strided_slice %12 {offsets = [32, 0], sizes = [32, 1], strides = [1, 1]} : vector<96x2xf32> to vector<32x1xf32>
    %29 = vector.extract_strided_slice %12 {offsets = [32, 1], sizes = [32, 1], strides = [1, 1]} : vector<96x2xf32> to vector<32x1xf32>
    %30 = vector.broadcast %11 : vector<1x128xf32> to vector<32x128xf32>
    %31 = vector.broadcast %29 : vector<32x1xf32> to vector<32x128xf32>
    %32 = arith.mulf %30, %31 : vector<32x128xf32>
    %33 = vector.broadcast %28 : vector<32x1xf32> to vector<32x128xf32>
    %34 = arith.addf %33, %32 : vector<32x128xf32>
    %35 = arith.addf %27, %34 : vector<32x128xf32>
    %36 = arith.negf %35 : vector<32x128xf32>
    %37 = math.exp %36 : vector<32x128xf32>
    %cst_7 = arith.constant 1.000000e+00 : f32
    %38 = vector.broadcast %cst_7 : f32 to vector<32x128xf32>
    %39 = arith.addf %38, %37 : vector<32x128xf32>
    %40 = arith.divf %38, %39 : vector<32x128xf32>
    %41 = arith.mulf %40, %0 : vector<32x128xf32>
    %42 = vector.extract_strided_slice %2 {offsets = [64, 0], sizes = [32, 128], strides = [1, 1]} : vector<96x128xf32> to vector<32x128xf32>
    %c0_8 = arith.constant 0 : index
    %c0_9 = arith.constant 0 : index
    %43 = vector.load %arg4[%c0_8, %c0_9] : memref<32x32xf32, #tpu.memory_space<vmem>>, vector<32x32xf32>
    %cst_10 = arith.constant dense<0.000000e+00> : vector<32x128xf32>
    %44 = tpu.matmul %43, %41, %cst_10 {dimension_numbers = #tpu.dot_dimension_numbers<[1], [0], [0], [1], [0, 0, 1, 1], [], []>} : vector<32x32xf32>, vector<32x128xf32>, vector<32x128xf32> -> vector<32x128xf32>
    %45 = arith.addf %42, %44 : vector<32x128xf32>
    %46 = vector.extract_strided_slice %12 {offsets = [64, 0], sizes = [32, 1], strides = [1, 1]} : vector<96x2xf32> to vector<32x1xf32>
    %47 = vector.extract_strided_slice %12 {offsets = [64, 1], sizes = [32, 1], strides = [1, 1]} : vector<96x2xf32> to vector<32x1xf32>
    %48 = vector.broadcast %11 : vector<1x128xf32> to vector<32x128xf32>
    %49 = vector.broadcast %47 : vector<32x1xf32> to vector<32x128xf32>
    %50 = arith.mulf %48, %49 : vector<32x128xf32>
    %51 = vector.broadcast %46 : vector<32x1xf32> to vector<32x128xf32>
    %52 = arith.addf %51, %50 : vector<32x128xf32>
    %53 = arith.addf %45, %52 : vector<32x128xf32>
    %54 = math.tanh %53 : vector<32x128xf32>
    %55 = arith.subf %54, %0 : vector<32x128xf32>
    %56 = arith.mulf %26, %55 : vector<32x128xf32>
    %57 = arith.addf %0, %56 : vector<32x128xf32>
    %c0_11 = arith.constant 0 : index
    %c0_12 = arith.constant 0 : index
    %58 = vector.load %arg6[%c0_11, %c0_12] : memref<32x128xf32, #tpu.memory_space<vmem>>, vector<32x128xf32>
    tpu.vector_store %arg6[%c0_11, %c0_12], %57 {strides = array<i32>} : memref<32x128xf32, #tpu.memory_space<vmem>>, vector<32x128xf32>,
    return
  }
  func.func @transform_0(%arg0: i32, %arg1: memref<1xi32, #tpu.memory_space<smem>>) -> (i32, i32) {
    %c0_i32 = arith.constant 0 : i32
    %c0_i32_0 = arith.constant 0 : i32
    return %c0_i32, %arg0 : i32, i32
  }
  func.func @transform_1(%arg0: i32, %arg1: memref<1xi32, #tpu.memory_space<smem>>) -> (i32, i32) {
    %c0_i32 = arith.constant 0 : i32
    %c0_i32_0 = arith.constant 0 : i32
    %c0_i32_1 = arith.constant 0 : i32
    return %c0_i32, %c0_i32_0 : i32, i32
  }
  func.func @transform_2(%arg0: i32, %arg1: memref<1xi32, #tpu.memory_space<smem>>) -> (i32, i32) {
    %c0_i32 = arith.constant 0 : i32
    %c0_i32_0 = arith.constant 0 : i32
    %c0_i32_1 = arith.constant 0 : i32
    return %c0_i32, %c0_i32_0 : i32, i32
  }
  func.func @transform_3(%arg0: i32, %arg1: memref<1xi32, #tpu.memory_space<smem>>) -> (i32, i32) {
    %c0_i32 = arith.constant 0 : i32
    %c0_i32_0 = arith.constant 0 : i32
    %c0_i32_1 = arith.constant 0 : i32
    return %c0_i32, %c0_i32_0 : i32, i32
  }
  func.func @transform_4(%arg0: i32, %arg1: memref<1xi32, #tpu.memory_space<smem>>) -> (i32, i32) {
    %c0_i32 = arith.constant 0 : i32
    %c0_i32_0 = arith.constant 0 : i32
    return %c0_i32, %arg0 : i32, i32
  }
}

</mosaic_0001>

<llo_original>
// kernel: tpu_custom_call.1
$region0: #{tpu_custom_call.1}
  #allocation0 [shape = 'u32[]', space=smem, size = 0x4, offset = 0x4, fixed_abs, tag = 'smem constant byte address 0x4 - core index']
  #allocation1 [shape = 'u32[72,128]{1,0:T(1,128)}', space=vmem, size = 0x9000, scoped, tag = 'internal scratch']
  #allocation2 [shape = 's32[1]{0}', space=sflag, size = 0x4, scoped, tag = 'scoped memory for tpu_custom_call.1']
  #allocation3 [shape = 's32[1]{0:T(128)S(6)}', space=smem, size = 0x200, scoped, tag = 'prefetched SMEM operand 0']
  %s0 = inlined_call_operand.<no memory space> [shape: s32[1], index: 0, kind: input, shape index: {}]
  %s1 = inlined_call_operand.vmem [shape: f32[32,256], index: 1, kind: input, shape index: {}]
  %s2 = inlined_call_operand.vmem [shape: f32[96,32], index: 2, kind: input, shape index: {}]
  %s3 = inlined_call_operand.vmem [shape: f32[32,32], index: 3, kind: input, shape index: {}]
  %s4 = inlined_call_operand.vmem [shape: f32[96,2], index: 4, kind: input, shape index: {}]
  %s5 = inlined_call_operand.hbm [shape: f32[32,256], index: 5, kind: output, shape index: {}]
  %s6 = sld [smem:[#allocation0]]
  $region87: #{tpu_custom_call.1} parent=0
    _
  %s8 = ssub.s32 1, %s6
  %s9 = scalar_select 0, %s8, %s6
  %10 = sst [smem:[#allocation3]] %s0
  $region1: #{tpu_custom_call.1} parent=0
    #allocation4 [shape = 'u8[32768]{0}', space=vmem, size = 0x8000, scoped, tag = 'input window, operand 1']
    #allocation5 [shape = 'u8[32768]{0}', space=vmem, size = 0x8000, scoped, tag = 'output window, operand 0']
    #allocation6 [shape = 's32[2]{0}', space=sflag, size = 0x8, scoped, tag = 'scoped memory for tpu_custom_call.1']
    %11 = vsyncpa [#allocation6], 0
    %s12 = scalar_lea.sflag [#allocation6], 1
    %13 = vsyncpa %s12, 0
    loop: start=0, step=1, limit=4
    $region2: #{tpu_custom_call.1} parent=1 // loop_pre_header
      _
    $region3: #{tpu_custom_call.1} parent=1 // loop_header
      %s15 = sphi 0, %s19
      %p16 = scmp.ge.s32.totalorder %s15, 4
      %s25 = sphi 0, %s27
      %s28 = sphi 0, %s25
      %s29 = sphi 0, %s28
      %s45 = sphi 0, %s29
      %s49 = sphi 0, %s49
      %s51 = sphi 0, %s49
      %s52 = sphi 0, %s51
      %s66 = sphi 0, %s52
      %s70 = sphi 0, %s70
      %s72 = sphi 0, %s70
      %s73 = sphi 0, %s72
      %s87 = sphi 0, %s73
      %s91 = sphi 0, %s91
      %s93 = sphi 0, %s91
      %s94 = sphi 0, %s93
      %s108 = sphi 0, %s94
      %s114 = sphi 0, %s116
      %s117 = sphi 0, %s114
      %s118 = sphi 0, %s117
      %s134 = sphi 0, %s118
    $region4: #{tpu_custom_call.1} parent=1 // loop_header_branch
      %18 = sbr.rel (%p16) target = $region8
    $region5: #{tpu_custom_call.1} parent=1 // loop_body
      %s20 = ssub.s32 %s15, 1
      %s21 = ssub.s32 %s15, 2
      %s22 = sadd.s32 %s15, 1
      %s23 = ssub.s32 %s15, %s22
      %p24 = scmp.eq.s32.totalorder %s23, 0
      %s26 = sadd.s32 %s25, 1
      %s27 = scalar_select %p24, %s25, %s26
      %p30 = pneg %p24
      %p31 = scmp.eq.s32.totalorder %s15, 1
      %p32 = por %p30, %p31
      %p33 = scmp.ne.s32.totalorder %s25, %s28
      %p34 = scmp.eq.s32.totalorder %s15, 0
      %p35 = por %p33, %p34
      %p36 = scmp.ne.s32.totalorder %s25, %s28
      %p37 = scmp.eq.s32.totalorder %s20, 1
      %p38 = por %p36, %p37
      %p39 = scmp.ne.s32.totalorder %s28, %s29
      %p40 = scmp.eq.s32.totalorder %s20, 0
      %p41 = por %p39, %p40
      %p42 = scmp.ne.s32.totalorder %s28, %s29
      %p43 = scmp.eq.s32.totalorder %s21, 1
      %p44 = por %p42, %p43
      %p46 = scmp.ne.s32.totalorder %s29, %s45
      %p47 = scmp.eq.s32.totalorder %s21, 0
      %p48 = por %p46, %p47
      %s50 = sadd.s32 %s49, 1
      %p53 = scmp.eq.s32.totalorder %s15, 1
      %p54 = scmp.ne.s32.totalorder %s49, %s51
      %p55 = scmp.eq.s32.totalorder %s15, 0
      %p56 = por %p54, %p55
      %p57 = scmp.ne.s32.totalorder %s49, %s51
      %p58 = scmp.eq.s32.totalorder %s20, 1
      %p59 = por %p57, %p58
      %p60 = scmp.ne.s32.totalorder %s51, %s52
      %p61 = scmp.eq.s32.totalorder %s20, 0
      %p62 = por %p60, %p61
      %p63 = scmp.ne.s32.totalorder %s51, %s52
      %p64 = scmp.eq.s32.totalorder %s21, 1
      %p65 = por %p63, %p64
      %p67 = scmp.ne.s32.totalorder %s52, %s66
      %p68 = scmp.eq.s32.totalorder %s21, 0
      %p69 = por %p67, %p68
      %s71 = sadd.s32 %s70, 1
      %p74 = scmp.eq.s32.totalorder %s15, 1
      %p75 = scmp.ne.s32.totalorder %s70, %s72
      %p76 = scmp.eq.s32.totalorder %s15, 0
      %p77 = por %p75, %p76
      %p78 = scmp.ne.s32.totalorder %s70, %s72
      %p79 = scmp.eq.s32.totalorder %s20, 1
      %p80 = por %p78, %p79
      %p81 = scmp.ne.s32.totalorder %s72, %s73
      %p82 = scmp.eq.s32.totalorder %s20, 0
      %p83 = por %p81, %p82
      %p84 = scmp.ne.s32.totalorder %s72, %s73
      %p85 = scmp.eq.s32.totalorder %s21, 1
      %p86 = por %p84, %p85
      %p88 = scmp.ne.s32.totalorder %s73, %s87
      %p89 = scmp.eq.s32.totalorder %s21, 0
      %p90 = por %p88, %p89
      %s92 = sadd.s32 %s91, 1
      %p95 = scmp.eq.s32.totalorder %s15, 1
      %p96 = scmp.ne.s32.totalorder %s91, %s93
      %p97 = scmp.eq.s32.totalorder %s15, 0
      %p98 = por %p96, %p97
      %p99 = scmp.ne.s32.totalorder %s91, %s93
      %p100 = scmp.eq.s32.totalorder %s20, 1
      %p101 = por %p99, %p100
      %p102 = scmp.ne.s32.totalorder %s93, %s94
      %p103 = scmp.eq.s32.totalorder %s20, 0
      %p104 = por %p102, %p103
      %p105 = scmp.ne.s32.totalorder %s93, %s94
      %p106 = scmp.eq.s32.totalorder %s21, 1
      %p107 = por %p105, %p106
      %p109 = scmp.ne.s32.totalorder %s94, %s108
      %p110 = scmp.eq.s32.totalorder %s21, 0
      %p111 = por %p109, %p110
      %s112 = ssub.s32 %s15, %s22
      %p113 = scmp.eq.s32.totalorder %s112, 0
      %s115 = sadd.s32 %s114, 1
      %s116 = scalar_select %p113, %s114, %s115
      %p119 = pneg %p113
      %p120 = scmp.eq.s32.totalorder %s15, 1
      %p121 = por %p119, %p120
      %p122 = scmp.ne.s32.totalorder %s114, %s117
      %p123 = scmp.eq.s32.totalorder %s15, 0
      %p124 = por %p122, %p123
      %p125 = scmp.ne.s32.totalorder %s114, %s117
      %p126 = scmp.eq.s32.totalorder %s20, 1
      %p127 = por %p125, %p126
      %p128 = scmp.ne.s32.totalorder %s117, %s118
      %p129 = scmp.eq.s32.totalorder %s20, 0
      %p130 = por %p128, %p129
      %p131 = scmp.ne.s32.totalorder %s117, %s118
      %p132 = scmp.eq.s32.totalorder %s21, 1
      %p133 = por %p131, %p132
      %p135 = scmp.ne.s32.totalorder %s118, %s134
      %p136 = scmp.eq.s32.totalorder %s21, 0
      %p137 = por %p135, %p136
      %p138 = scmp.le.s32.totalorder 1, %s15
      %p139 = scmp.lt.s32.totalorder %s15, 3
      %p140 = pnand %p138, %p139
      %p141 = pneg %p140
      // Predicated region
      $region9: #{tpu_custom_call.1} parent=5 // pred_check
        _
      $region10: #{tpu_custom_call.1} parent=5 // pred_check_branch
        %143 = sbr.rel (%p140) target = $region12
      $region11: #{tpu_custom_call.1} parent=5 // pred_region
        %s144 = ssub.s32 %s15, 1
        // Predicated region
        $region13: #{tpu_custom_call.1} parent=11 // pred_check
          %p145 = pneg %p62
        $region14: #{tpu_custom_call.1} parent=11 // pred_check_branch
          %147 = sbr.rel (%p145) target = $region16
        $region15: #{tpu_custom_call.1} parent=11 // pred_region
          _
        $region16: #{tpu_custom_call.1} parent=11 // pred_fallthru
          _
        // Predicated region
        $region17: #{tpu_custom_call.1} parent=11 // pred_check
          %p148 = pneg %p83
        $region18: #{tpu_custom_call.1} parent=11 // pred_check_branch
          %150 = sbr.rel (%p148) target = $region20
        $region19: #{tpu_custom_call.1} parent=11 // pred_region
          _
        $region20: #{tpu_custom_call.1} parent=11 // pred_fallthru
          _
        // Predicated region
        $region21: #{tpu_custom_call.1} parent=11 // pred_check
          %p151 = pneg %p104
        $region22: #{tpu_custom_call.1} parent=11 // pred_check_branch
          %153 = sbr.rel (%p151) target = $region24
        $region23: #{tpu_custom_call.1} parent=11 // pred_region
          _
        $region24: #{tpu_custom_call.1} parent=11 // pred_fallthru
          _
      $region12: #{tpu_custom_call.1} parent=5 // pred_fallthru
        _
      %p154 = scmp.lt.s32.totalorder %s15, 2
      // Predicated region
      $region25: #{tpu_custom_call.1} parent=5 // pred_check
        %p155 = pneg %p154
      $region26: #{tpu_custom_call.1} parent=5 // pred_check_branch
        %157 = sbr.rel (%p155) target = $region28
      $region27: #{tpu_custom_call.1} parent=5 // pred_region
        // Predicated region
        $region29: #{tpu_custom_call.1} parent=27 // pred_check
          %p158 = pneg %p35
        $region30: #{tpu_custom_call.1} parent=27 // pred_check_branch
          %160 = sbr.rel (%p158) target = $region32
        $region31: #{tpu_custom_call.1} parent=27 // pred_region
          %s161 = sand.u32 %s25, 1
          %s162 = sand.u32 %s25, 1
          %s163 = smul.addr %s162, 32
          %s164 = scalar_lea.vmem [#allocation4], %s163
          %s165 = smul.addr %s15, 8
          %s166 = scalar_lea.vmem %s1, %s165
          // Predicated region
          $region33: #{tpu_custom_call.1} parent=31 // pred_check
            _
          $region34: #{tpu_custom_call.1} parent=31 // pred_check_branch
            %168 = sbr.rel (0) target = $region36
          $region35: #{tpu_custom_call.1} parent=31 // pred_region
            // Predicated region
            $region37: #{tpu_custom_call.1} parent=35 // pred_check
              _
            $region38: #{tpu_custom_call.1} parent=35 // pred_check_branch
              %170 = sbr.rel (0) target = $region40
            $region39: #{tpu_custom_call.1} parent=35 // pred_region
              // Predicated region
              $region52: #{tpu_custom_call.1} parent=39 // pred_check
                _
              $region53: #{tpu_custom_call.1} parent=39 // pred_check_branch
                %192 = sbr.rel (0) target = $region55
              $region54: #{tpu_custom_call.1} parent=39 // pred_region
                loop: start=0, step=1, limit=1
                $region56: #{tpu_custom_call.1} parent=54 // loop_pre_header
                  _
                $region57: #{tpu_custom_call.1} parent=54 // loop_header
                  %s194 = sphi 0, %s198
                  %p195 = scmp.ge.s32.totalorder %s194, 1
                  %s199 = sphi %s166, %s166
                  %s200 = sphi %s164, %s164
                $region58: #{tpu_custom_call.1} parent=54 // loop_header_branch
                  %197 = sbr.rel (%p195) target = $region62
                $region59: #{tpu_custom_call.1} parent=54 // loop_body
                  %v201 = vld [vmem:[%s199] sm:$0xff]
                  %202 = vst [vmem:[%s200] sm:$0xff] %v201
                  %v203 = vld [vmem:[%s199 + $0x10] sm:$0xff]
                  %204 = vst [vmem:[%s200 + $0x8] sm:$0xff] %v203
                  %v205 = vld [vmem:[%s199 + $0x20] sm:$0xff]
                  %206 = vst [vmem:[%s200 + $0x10] sm:$0xff] %v205
                  %v207 = vld [vmem:[%s199 + $0x30] sm:$0xff]
                  %208 = vst [vmem:[%s200 + $0x18] sm:$0xff] %v207
                $region60: #{tpu_custom_call.1} parent=54 // loop_footer
                  %s198 = sadd.s32 1, %s194
                $region61: #{tpu_custom_call.1} parent=54 // loop_footer_branch
                  %193 = sbr.rel target = $region57
                $region62: #{tpu_custom_call.1} parent=54 // loop_exit
                  _
              $region55: #{tpu_custom_call.1} parent=39 // pred_fallthru
                _
              // Predicated region
              $region63: #{tpu_custom_call.1} parent=39 // pred_check
                _
              $region64: #{tpu_custom_call.1} parent=39 // pred_check_branch
                %210 = sbr.rel target = $region66
              $region65: #{tpu_custom_call.1} parent=39 // pred_region
                _
              $region66: #{tpu_custom_call.1} parent=39 // pred_fallthru
                _
            $region40: #{tpu_custom_call.1} parent=35 // pred_fallthru
              _
            // Predicated region
            $region41: #{tpu_custom_call.1} parent=35 // pred_check
              _
            $region42: #{tpu_custom_call.1} parent=35 // pred_check_branch
              %172 = sbr.rel target = $region44
            $region43: #{tpu_custom_call.1} parent=35 // pred_region
              %s174 = ssub.s32 256, 1
              loop: start=0, step=1, limit=1
              $region45: #{tpu_custom_call.1} parent=43 // loop_pre_header
                _
              $region46: #{tpu_custom_call.1} parent=43 // loop_header
                %s176 = sphi 0, %s180
                %p177 = scmp.ge.s32.totalorder %s176, 1
                %s181 = sphi %s166, %s166
                %s182 = sphi %s164, %s164
              $region47: #{tpu_custom_call.1} parent=43 // loop_header_branch
                %179 = sbr.rel (%p177) target = $region51
              $region48: #{tpu_custom_call.1} parent=43 // loop_body
                %v183 = vld [vmem:[%s181] sm:%s174]
                %184 = vst [vmem:[%s182] sm:%s174] %v183
                %v185 = vld [vmem:[%s181 + $0x10] sm:%s174]
                %186 = vst [vmem:[%s182 + $0x8] sm:%s174] %v185
                %v187 = vld [vmem:[%s181 + $0x20] sm:%s174]
                %188 = vst [vmem:[%s182 + $0x10] sm:%s174] %v187
                %v189 = vld [vmem:[%s181 + $0x30] sm:%s174]
                %190 = vst [vmem:[%s182 + $0x18] sm:%s174] %v189
              $region49: #{tpu_custom_call.1} parent=43 // loop_footer
                %s180 = sadd.s32 1, %s176
              $region50: #{tpu_custom_call.1} parent=43 // loop_footer_branch
                %175 = sbr.rel target = $region46
              $region51: #{tpu_custom_call.1} parent=43 // loop_exit
                _
            $region44: #{tpu_custom_call.1} parent=35 // pred_fallthru
              _
          $region36: #{tpu_custom_call.1} parent=31 // pred_fallthru
            _
          %211 = vnop
        $region32: #{tpu_custom_call.1} parent=27 // pred_fallthru
          _
      $region28: #{tpu_custom_call.1} parent=5 // pred_fallthru
        _
      %p212 = scmp.le.s32.totalorder 1, %s15
      %p213 = scmp.lt.s32.totalorder %s15, 3
      %p214 = pnand %p212, %p213
      %p215 = pneg %p214
      // Predicated region
      $region67: #{tpu_custom_call.1} parent=5 // pred_check
        _
      $region68: #{tpu_custom_call.1} parent=5 // pred_check_branch
        %217 = sbr.rel (%p214) target = $region70
      $region69: #{tpu_custom_call.1} parent=5 // pred_region
        %s218 = ssub.s32 %s15, 1
        %s219 = sand.u32 %s28, 1
        %s220 = sand.u32 %s28, 1
        %s221 = smul.addr %s220, 32
        %s222 = scalar_lea.vmem [#allocation4], %s221
        // Predicated region
        $region71: #{tpu_custom_call.1} parent=69 // pred_check
          %p223 = pneg %p41
        $region72: #{tpu_custom_call.1} parent=69 // pred_check_branch
          %225 = sbr.rel (%p223) target = $region74
        $region73: #{tpu_custom_call.1} parent=69 // pred_region
          _
        $region74: #{tpu_custom_call.1} parent=69 // pred_fallthru
          _
        %s226 = sand.u32 %s28, 1
        %s227 = sand.u32 %s28, 1
        %s228 = smul.addr %s227, 32
        %s229 = scalar_lea.vmem [#allocation4], %s228
        %p230 = pneg %p41
        %p231 = pneg %p38
        %p232 = pneg %p62
        %p233 = pneg %p59
        %p234 = pneg %p83
        %p235 = pneg %p80
        %p236 = pneg %p104
        %p237 = pneg %p101
        %p238 = pneg %p130
        %p239 = pneg %p127
        %s240 = sand.u32 %s117, 1
        %s241 = scalar_lea.sflag [#allocation6], %s240
        %s242 = sand.u32 %s117, 1
        %s243 = smul.addr %s242, 32
        %s244 = scalar_lea.vmem [#allocation5], %s243
        %v245 = vld [vmem:[%s222] sm:$0xff]
        %v246 = vld [vmem:[%s222 + $0x8] sm:$0xff]
        %v247 = vld [vmem:[%s222 + $0x10] sm:$0xff]
        %v248 = vld [vmem:[%s222 + $0x18] sm:$0xff]
        %v249 = vld [vmem:[%s2] sm:$0xff]
        %v250 = vld [vmem:[%s2 + $0x8] sm:$0xff]
        %v251 = vld [vmem:[%s2 + $0x10] sm:$0xff]
        %v252 = vld [vmem:[%s2 + $0x18] sm:$0xff]
        %v253 = vld [vmem:[%s2 + $0x20] sm:$0xff]
        %v254 = vld [vmem:[%s2 + $0x28] sm:$0xff]
        %v255 = vld [vmem:[%s2 + $0x30] sm:$0xff]
        %v256 = vld [vmem:[%s2 + $0x38] sm:$0xff]
        %v257 = vld [vmem:[%s2 + $0x40] sm:$0xff]
        %v258 = vld [vmem:[%s2 + $0x48] sm:$0xff]
        %v259 = vld [vmem:[%s2 + $0x50] sm:$0xff]
        %v260 = vld [vmem:[%s2 + $0x58] sm:$0xff]
        %vm261 = vcmask 261120
        %v263 = vsel %vm261, %v249, 0
        %v266 = vsel %vm261, %v250, 0
        %v269 = vsel %vm261, %v251, 0
        %v272 = vsel %vm261, %v252, 0
        %v275 = vsel %vm261, %v253, 0
        %v278 = vsel %vm261, %v254, 0
        %v281 = vsel %vm261, %v255, 0
        %v284 = vsel %vm261, %v256, 0
        %v287 = vsel %vm261, %v257, 0
        %v290 = vsel %vm261, %v258, 0
        %v293 = vsel %vm261, %v259, 0
        %v296 = vsel %vm261, %v260, 0
        %298 = vmatpush.msra.mxu0 0.0
        %299 = vmatpush.msra.mxu0 0.0
        %300 = vmatpush.msra.mxu0 0.0
        %301 = vmatpush.msra.mxu0 0.0
        %302 = vmatpush.msra.mxu0 0.0
        %303 = vmatpush.msra.mxu0 0.0
        %304 = vmatpush.msra.mxu0 0.0
        %305 = vmatpush.msra.mxu0 0.0
        %306 = vmatpush.msra.mxu0 0.0
        %307 = vmatpush.msra.mxu0 0.0
        %308 = vmatpush.msra.mxu0 0.0
        %309 = vmatpush.msra.mxu0 0.0
        %310 = vmatpush.msra.mxu0 %v248
        %311 = vmatpush.msra.mxu0 %v247
        %312 = vmatpush.msra.mxu0 %v246
        %313 = vmatpush.msra.mxu0 %v245
        %314 = vmatmul.f32.gmra.mxu0 %v263
        %v315 = vpop.f32.mrf.mxu0
        %v316 = vadd.f32 0.0, %v315
        %317 = vmatmul.f32.gmra.mxu0 %v266
        %v318 = vpop.f32.mrf.mxu0
        %v319 = vadd.f32 0.0, %v318
        %320 = vmatmul.f32.gmra.mxu0 %v269
        %v321 = vpop.f32.mrf.mxu0
        %v322 = vadd.f32 0.0, %v321
        %323 = vmatmul.f32.gmra.mxu0 %v272
        %v324 = vpop.f32.mrf.mxu0
        %v325 = vadd.f32 0.0, %v324
        %326 = vmatmul.f32.gmra.mxu0 %v275
        %v327 = vpop.f32.mrf.mxu0
        %v328 = vadd.f32 0.0, %v327
        %329 = vmatmul.f32.gmra.mxu0 %v278
        %v330 = vpop.f32.mrf.mxu0
        %v331 = vadd.f32 0.0, %v330
        %332 = vmatmul.f32.gmra.mxu0 %v281
        %v333 = vpop.f32.mrf.mxu0
        %v334 = vadd.f32 0.0, %v333
        %335 = vmatmul.f32.gmra.mxu0 %v284
        %v336 = vpop.f32.mrf.mxu0
        %v337 = vadd.f32 0.0, %v336
        %338 = vmatmul.f32.gmra.mxu0 %v287
        %v339 = vpop.f32.mrf.mxu0
        %v340 = vadd.f32 0.0, %v339
        %341 = vmatmul.f32.gmra.mxu0 %v290
        %v342 = vpop.f32.mrf.mxu0
        %v343 = vadd.f32 0.0, %v342
        %344 = vmatmul.f32.gmra.mxu0 %v293
        %v345 = vpop.f32.mrf.mxu0
        %v346 = vadd.f32 0.0, %v345
        %347 = vmatmul.f32.gmra.mxu0 %v296
        %v348 = vpop.f32.mrf.mxu0
        %v349 = vadd.f32 0.0, %v348
        %350 = vdwg.mxu0
        %s351 = sld [smem:[#allocation3]]
        %s352 = smul.u32 %s20, 128
        %v353 = vlaneseq
        %v354 = vand.u32 %v353, 127
        %v355 = vstv %s352
        %v356 = vadd.s32 %v355, %v354
        %v357 = vstv %s351
        %vm358 = vcmp.ge.s32.totalorder %v356, %v357
        %v359 = vsel %vm358, 1, 0
        %v360 = vcvt.s32.f32 %v359
        %v361 = vld [vmem:[%s4] sm:$0xff]
        %v362 = vld [vmem:[%s4 + $0x8] sm:$0xff]
        %v363 = vld [vmem:[%s4 + $0x10] sm:$0xff]
        %v364 = vld [vmem:[%s4 + $0x18] sm:$0xff]
        %v365 = vld [vmem:[%s4 + $0x20] sm:$0xff]
        %v366 = vld [vmem:[%s4 + $0x28] sm:$0xff]
        %v367 = vld [vmem:[%s4 + $0x30] sm:$0xff]
        %v368 = vld [vmem:[%s4 + $0x38] sm:$0xff]
        %v369 = vld [vmem:[%s4 + $0x40] sm:$0xff]
        %v370 = vld [vmem:[%s4 + $0x48] sm:$0xff]
        %v371 = vld [vmem:[%s4 + $0x50] sm:$0xff]
        %v372 = vld [vmem:[%s4 + $0x58] sm:$0xff]
        %374 = vset.pattern.permute.xlu0 1
        %375 = vperm.xlu0 %374, %v361
        %v376 = vpop.permute.xlu0 %375
        %379 = vset.pattern.permute.xlu0 1
        %380 = vperm.xlu0 %379, %v362
        %v381 = vpop.permute.xlu0 %380
        %384 = vset.pattern.permute.xlu0 1
        %385 = vperm.xlu0 %384, %v363
        %v386 = vpop.permute.xlu0 %385
        %389 = vset.pattern.permute.xlu0 1
        %390 = vperm.xlu0 %389, %v364
        %v391 = vpop.permute.xlu0 %390
        %v393 = vmul.f32 %v360, %v376
        %v394 = vmul.f32 %v360, %v381
        %v395 = vmul.f32 %v360, %v386
        %v396 = vmul.f32 %v360, %v391
        %397 = vset.pattern.permute.xlu0 0
        %398 = vperm.xlu0 %397, %v361
        %v399 = vpop.permute.xlu0 %398
        %401 = vset.pattern.permute.xlu0 0
        %402 = vperm.xlu0 %401, %v362
        %v403 = vpop.permute.xlu0 %402
        %405 = vset.pattern.permute.xlu0 0
        %406 = vperm.xlu0 %405, %v363
        %v407 = vpop.permute.xlu0 %406
        %409 = vset.pattern.permute.xlu0 0
        %410 = vperm.xlu0 %409, %v364
        %v411 = vpop.permute.xlu0 %410
        %v413 = vadd.f32 %v399, %v393
        %v414 = vadd.f32 %v403, %v394
        %v415 = vadd.f32 %v407, %v395
        %v416 = vadd.f32 %v411, %v396
        %v417 = vadd.f32 %v316, %v413
        %v418 = vadd.f32 %v319, %v414
        %v419 = vadd.f32 %v322, %v415
        %v420 = vadd.f32 %v325, %v416
        %v421 = vxor.u32 %v417, 2147483648
        %v422 = vxor.u32 %v418, 2147483648
        %v423 = vxor.u32 %v419, 2147483648
        %v424 = vxor.u32 %v420, 2147483648
        %v425 = vmul.f32 %v421, 1.442695
        %v426 = vpow.pop %v425
        %v427 = vmul.f32 %v422, 1.442695
        %v428 = vpow.pop %v427
        %v429 = vmul.f32 %v423, 1.442695
        %v430 = vpow.pop %v429
        %v431 = vmul.f32 %v424, 1.442695
        %v432 = vpow.pop %v431
        %v433 = vadd.f32 %v426, 1.0
        %v434 = vadd.f32 %v428, 1.0
        %v435 = vadd.f32 %v430, 1.0
        %v436 = vadd.f32 %v432, 1.0
        %v437 = vrcp.pop %v433
        %v438 = vmul.f32 %v433, %v437
        %v439 = vsub.f32 1.0, %v438
        %v440 = vmul.f32 %v437, %v439
        %v441 = vadd.f32 %v437, %v440
        %vm442 = vweird.f32 %v433
        %vm443 = vweird.f32 %v437
        %vm444 = vmor %vm442, %vm443
        %v445 = vsel %vm444, %v437, %v441
        %v446 = vand.u32 2147483647, %v433
        %vm447 = vcmp.eq.f32.partialorder %v446, 8.507059e+37
        %v448 = vand.u32 %v433, 2147483648
        %v449 = vor.u32 1.1754944e-38, %v448
        %v450 = vsel %vm447, %v449, %v445
        %v451 = vmul.f32 1.0, %v450
        %v452 = vrcp.pop %v434
        %v453 = vmul.f32 %v434, %v452
        %v454 = vsub.f32 1.0, %v453
        %v455 = vmul.f32 %v452, %v454
        %v456 = vadd.f32 %v452, %v455
        %vm457 = vweird.f32 %v434
        %vm458 = vweird.f32 %v452
        %vm459 = vmor %vm457, %vm458
        %v460 = vsel %vm459, %v452, %v456
        %v461 = vand.u32 2147483647, %v434
        %vm462 = vcmp.eq.f32.partialorder %v461, 8.507059e+37
        %v463 = vand.u32 %v434, 2147483648
        %v464 = vor.u32 1.1754944e-38, %v463
        %v465 = vsel %vm462, %v464, %v460
        %v466 = vmul.f32 1.0, %v465
        %v467 = vrcp.pop %v435
        %v468 = vmul.f32 %v435, %v467
        %v469 = vsub.f32 1.0, %v468
        %v470 = vmul.f32 %v467, %v469
        %v471 = vadd.f32 %v467, %v470
        %vm472 = vweird.f32 %v435
        %vm473 = vweird.f32 %v467
        %vm474 = vmor %vm472, %vm473
        %v475 = vsel %vm474, %v467, %v471
        %v476 = vand.u32 2147483647, %v435
        %vm477 = vcmp.eq.f32.partialorder %v476, 8.507059e+37
        %v478 = vand.u32 %v435, 2147483648
        %v479 = vor.u32 1.1754944e-38, %v478
        %v480 = vsel %vm477, %v479, %v475
        %v481 = vmul.f32 1.0, %v480
        %v482 = vrcp.pop %v436
        %v483 = vmul.f32 %v436, %v482
        %v484 = vsub.f32 1.0, %v483
        %v485 = vmul.f32 %v482, %v484
        %v486 = vadd.f32 %v482, %v485
        %vm487 = vweird.f32 %v436
        %vm488 = vweird.f32 %v482
        %vm489 = vmor %vm487, %vm488
        %v490 = vsel %vm489, %v482, %v486
        %v491 = vand.u32 2147483647, %v436
        %vm492 = vcmp.eq.f32.partialorder %v491, 8.507059e+37
        %v493 = vand.u32 %v436, 2147483648
        %v494 = vor.u32 1.1754944e-38, %v493
        %v495 = vsel %vm492, %v494, %v490
        %v496 = vmul.f32 1.0, %v495
        %498 = vset.pattern.permute.xlu0 1
        %499 = vperm.xlu0 %498, %v365
        %v500 = vpop.permute.xlu0 %499
        %503 = vset.pattern.permute.xlu0 1
        %504 = vperm.xlu0 %503, %v366
        %v505 = vpop.permute.xlu0 %504
        %508 = vset.pattern.permute.xlu0 1
        %509 = vperm.xlu0 %508, %v367
        %v510 = vpop.permute.xlu0 %509
        %513 = vset.pattern.permute.xlu0 1
        %514 = vperm.xlu0 %513, %v368
        %v515 = vpop.permute.xlu0 %514
        %v517 = vmul.f32 %v360, %v500
        %v518 = vmul.f32 %v360, %v505
        %v519 = vmul.f32 %v360, %v510
        %v520 = vmul.f32 %v360, %v515
        %521 = vset.pattern.permute.xlu0 0
        %522 = vperm.xlu0 %521, %v365
        %v523 = vpop.permute.xlu0 %522
        %525 = vset.pattern.permute.xlu0 0
        %526 = vperm.xlu0 %525, %v366
        %v527 = vpop.permute.xlu0 %526
        %529 = vset.pattern.permute.xlu0 0
        %530 = vperm.xlu0 %529, %v367
        %v531 = vpop.permute.xlu0 %530
        %533 = vset.pattern.permute.xlu0 0
        %534 = vperm.xlu0 %533, %v368
        %v535 = vpop.permute.xlu0 %534
        %v537 = vadd.f32 %v523, %v517
        %v538 = vadd.f32 %v527, %v518
        %v539 = vadd.f32 %v531, %v519
        %v540 = vadd.f32 %v535, %v520
        %v541 = vadd.f32 %v328, %v537
        %v542 = vadd.f32 %v331, %v538
        %v543 = vadd.f32 %v334, %v539
        %v544 = vadd.f32 %v337, %v540
        %v545 = vxor.u32 %v541, 2147483648
        %v546 = vxor.u32 %v542, 2147483648
        %v547 = vxor.u32 %v543, 2147483648
        %v548 = vxor.u32 %v544, 2147483648
        %v549 = vmul.f32 %v545, 1.442695
        %v550 = vpow.pop %v549
        %v551 = vmul.f32 %v546, 1.442695
        %v552 = vpow.pop %v551
        %v553 = vmul.f32 %v547, 1.442695
        %v554 = vpow.pop %v553
        %v555 = vmul.f32 %v548, 1.442695
        %v556 = vpow.pop %v555
        %v557 = vadd.f32 %v550, 1.0
        %v558 = vadd.f32 %v552, 1.0
        %v559 = vadd.f32 %v554, 1.0
        %v560 = vadd.f32 %v556, 1.0
        %v561 = vrcp.pop %v557
        %v562 = vmul.f32 %v557, %v561
        %v563 = vsub.f32 1.0, %v562
        %v564 = vmul.f32 %v561, %v563
        %v565 = vadd.f32 %v561, %v564
        %vm566 = vweird.f32 %v557
        %vm567 = vweird.f32 %v561
        %vm568 = vmor %vm566, %vm567
        %v569 = vsel %vm568, %v561, %v565
        %v570 = vand.u32 2147483647, %v557
        %vm571 = vcmp.eq.f32.partialorder %v570, 8.507059e+37
        %v572 = vand.u32 %v557, 2147483648
        %v573 = vor.u32 1.1754944e-38, %v572
        %v574 = vsel %vm571, %v573, %v569
        %v575 = vmul.f32 1.0, %v574
        %v576 = vrcp.pop %v558
        %v577 = vmul.f32 %v558, %v576
        %v578 = vsub.f32 1.0, %v577
        %v579 = vmul.f32 %v576, %v578
        %v580 = vadd.f32 %v576, %v579
        %vm581 = vweird.f32 %v558
        %vm582 = vweird.f32 %v576
        %vm583 = vmor %vm581, %vm582
        %v584 = vsel %vm583, %v576, %v580
        %v585 = vand.u32 2147483647, %v558
        %vm586 = vcmp.eq.f32.partialorder %v585, 8.507059e+37
        %v587 = vand.u32 %v558, 2147483648
        %v588 = vor.u32 1.1754944e-38, %v587
        %v589 = vsel %vm586, %v588, %v584
        %v590 = vmul.f32 1.0, %v589
        %v591 = vrcp.pop %v559
        %v592 = vmul.f32 %v559, %v591
        %v593 = vsub.f32 1.0, %v592
        %v594 = vmul.f32 %v591, %v593
        %v595 = vadd.f32 %v591, %v594
        %vm596 = vweird.f32 %v559
        %vm597 = vweird.f32 %v591
        %vm598 = vmor %vm596, %vm597
        %v599 = vsel %vm598, %v591, %v595
        %v600 = vand.u32 2147483647, %v559
        %vm601 = vcmp.eq.f32.partialorder %v600, 8.507059e+37
        %v602 = vand.u32 %v559, 2147483648
        %v603 = vor.u32 1.1754944e-38, %v602
        %v604 = vsel %vm601, %v603, %v599
        %v605 = vmul.f32 1.0, %v604
        %v606 = vrcp.pop %v560
        %v607 = vmul.f32 %v560, %v606
        %v608 = vsub.f32 1.0, %v607
        %v609 = vmul.f32 %v606, %v608
        %v610 = vadd.f32 %v606, %v609
        %vm611 = vweird.f32 %v560
        %vm612 = vweird.f32 %v606
        %vm613 = vmor %vm611, %vm612
        %v614 = vsel %vm613, %v606, %v610
        %v615 = vand.u32 2147483647, %v560
        %vm616 = vcmp.eq.f32.partialorder %v615, 8.507059e+37
        %v617 = vand.u32 %v560, 2147483648
        %v618 = vor.u32 1.1754944e-38, %v617
        %v619 = vsel %vm616, %v618, %v614
        %v620 = vmul.f32 1.0, %v619
        %v621 = vmul.f32 %v575, %v245
        %v622 = vmul.f32 %v590, %v246
        %v623 = vmul.f32 %v605, %v247
        %v624 = vmul.f32 %v620, %v248
        %v625 = vld [vmem:[%s3] sm:$0xff]
        %v626 = vld [vmem:[%s3 + $0x8] sm:$0xff]
        %v627 = vld [vmem:[%s3 + $0x10] sm:$0xff]
        %v628 = vld [vmem:[%s3 + $0x18] sm:$0xff]
        %v630 = vsel %vm261, %v625, 0
        %v633 = vsel %vm261, %v626, 0
        %v636 = vsel %vm261, %v627, 0
        %v639 = vsel %vm261, %v628, 0
        %641 = vmatpush.msra.mxu0 0.0
        %642 = vmatpush.msra.mxu0 0.0
        %643 = vmatpush.msra.mxu0 0.0
        %644 = vmatpush.msra.mxu0 0.0
        %645 = vmatpush.msra.mxu0 0.0
        %646 = vmatpush.msra.mxu0 0.0
        %647 = vmatpush.msra.mxu0 0.0
        %648 = vmatpush.msra.mxu0 0.0
        %649 = vmatpush.msra.mxu0 0.0
        %650 = vmatpush.msra.mxu0 0.0
        %651 = vmatpush.msra.mxu0 0.0
        %652 = vmatpush.msra.mxu0 0.0
        %653 = vmatpush.msra.mxu0 %v624
        %654 = vmatpush.msra.mxu0 %v623
        %655 = vmatpush.msra.mxu0 %v622
        %656 = vmatpush.msra.mxu0 %v621
        %657 = vmatmul.f32.gmra.mxu0 %v630
        %v658 = vpop.f32.mrf.mxu0
        %v659 = vadd.f32 0.0, %v658
        %660 = vmatmul.f32.gmra.mxu0 %v633
        %v661 = vpop.f32.mrf.mxu0
        %v662 = vadd.f32 0.0, %v661
        %663 = vmatmul.f32.gmra.mxu0 %v636
        %v664 = vpop.f32.mrf.mxu0
        %v665 = vadd.f32 0.0, %v664
        %666 = vmatmul.f32.gmra.mxu0 %v639
        %v667 = vpop.f32.mrf.mxu0
        %v668 = vadd.f32 0.0, %v667
        %669 = vdwg.mxu0
        %v670 = vadd.f32 %v340, %v659
        %v671 = vadd.f32 %v343, %v662
        %v672 = vadd.f32 %v346, %v665
        %v673 = vadd.f32 %v349, %v668
        %675 = vset.pattern.permute.xlu0 1
        %676 = vperm.xlu0 %675, %v369
        %v677 = vpop.permute.xlu0 %676
        %680 = vset.pattern.permute.xlu0 1
        %681 = vperm.xlu0 %680, %v370
        %v682 = vpop.permute.xlu0 %681
        %685 = vset.pattern.permute.xlu0 1
        %686 = vperm.xlu0 %685, %v371
        %v687 = vpop.permute.xlu0 %686
        %690 = vset.pattern.permute.xlu0 1
        %691 = vperm.xlu0 %690, %v372
        %v692 = vpop.permute.xlu0 %691
        %v694 = vmul.f32 %v360, %v677
        %v695 = vmul.f32 %v360, %v682
        %v696 = vmul.f32 %v360, %v687
        %v697 = vmul.f32 %v360, %v692
        %698 = vset.pattern.permute.xlu0 0
        %699 = vperm.xlu0 %698, %v369
        %v700 = vpop.permute.xlu0 %699
        %702 = vset.pattern.permute.xlu0 0
        %703 = vperm.xlu0 %702, %v370
        %v704 = vpop.permute.xlu0 %703
        %706 = vset.pattern.permute.xlu0 0
        %707 = vperm.xlu0 %706, %v371
        %v708 = vpop.permute.xlu0 %707
        %710 = vset.pattern.permute.xlu0 0
        %711 = vperm.xlu0 %710, %v372
        %v712 = vpop.permute.xlu0 %711
        %v714 = vadd.f32 %v700, %v694
        %v715 = vadd.f32 %v704, %v695
        %v716 = vadd.f32 %v708, %v696
        %v717 = vadd.f32 %v712, %v697
        %v718 = vadd.f32 %v670, %v714
        %v719 = vadd.f32 %v671, %v715
        %v720 = vadd.f32 %v672, %v716
        %v721 = vadd.f32 %v673, %v717
        %v722 = vtanh.pop %v718
        %v723 = vtanh.pop %v719
        %v724 = vtanh.pop %v720
        %v725 = vtanh.pop %v721
        %v726 = vsub.f32 %v722, %v245
        %v727 = vsub.f32 %v723, %v246
        %v728 = vsub.f32 %v724, %v247
        %v729 = vsub.f32 %v725, %v248
        %v730 = vmul.f32 %v451, %v726
        %v731 = vmul.f32 %v466, %v727
        %v732 = vmul.f32 %v481, %v728
        %v733 = vmul.f32 %v496, %v729
        %v734 = vadd.f32 %v245, %v730
        %v735 = vadd.f32 %v246, %v731
        %v736 = vadd.f32 %v247, %v732
        %v737 = vadd.f32 %v248, %v733
        %738 = vst [vmem:[%s244] sm:$0xff] %v734
        %739 = vst [vmem:[%s244 + $0x8] sm:$0xff] %v735
        %740 = vst [vmem:[%s244 + $0x10] sm:$0xff] %v736
        %741 = vst [vmem:[%s244 + $0x18] sm:$0xff] %v737
        %s742 = sand.u32 %s117, 1
        %s743 = scalar_lea.sflag [#allocation6], %s742
        %s744 = sand.u32 %s117, 1
        %s745 = smul.addr %s744, 32
        %s746 = scalar_lea.vmem [#allocation5], %s745
        // Predicated region
        $region75: #{tpu_custom_call.1} parent=69 // pred_check
          %p747 = pneg %p127
        $region76: #{tpu_custom_call.1} parent=69 // pred_check_branch
          %749 = sbr.rel (%p747) target = $region78
        $region77: #{tpu_custom_call.1} parent=69 // pred_region
          %751 = vsyncadd %s743, 0
          %s752 = smul.addr %s20, 8
          %s753 = scalar_lea.hbm %s5, %s752
          %s754 = sshll.u32 %s746, 4
          %s755 = int_to_ptr.vmem [resolvable:$true] %s754
          %s756 = sshll.u32 %s753, 4
          %s757 = int_to_ptr.hbm [resolvable:$true] %s756
          %762 = dma.vmem_to_hbm [thread:$0]  %s755, 512, %s757, %s743, 128, 256, 8
        $region78: #{tpu_custom_call.1} parent=69 // pred_fallthru
          _
      $region70: #{tpu_custom_call.1} parent=5 // pred_fallthru
        _
      %p763 = scmp.le.s32.totalorder 2, %s15
      // Predicated region
      $region79: #{tpu_custom_call.1} parent=5 // pred_check
        %p764 = pneg %p763
      $region80: #{tpu_custom_call.1} parent=5 // pred_check_branch
        %766 = sbr.rel (%p764) target = $region82
      $region81: #{tpu_custom_call.1} parent=5 // pred_region
        %s767 = ssub.s32 %s15, 2
        // Predicated region
        $region83: #{tpu_custom_call.1} parent=81 // pred_check
          %p768 = pneg %p133
        $region84: #{tpu_custom_call.1} parent=81 // pred_check_branch
          %770 = sbr.rel (%p768) target = $region86
        $region85: #{tpu_custom_call.1} parent=81 // pred_region
          %s771 = sand.u32 %s118, 1
          %s772 = scalar_lea.sflag [#allocation6], %s771
          %s773 = sand.u32 %s118, 1
          %s774 = smul.addr %s773, 32
          %s775 = scalar_lea.vmem [#allocation5], %s774
          %777 = dma.done %s772, 512
        $region86: #{tpu_custom_call.1} parent=81 // pred_fallthru
          _
      $region82: #{tpu_custom_call.1} parent=5 // pred_fallthru
        _
    $region6: #{tpu_custom_call.1} parent=1 // loop_footer
      %s19 = sadd.s32 1, %s15
    $region7: #{tpu_custom_call.1} parent=1 // loop_footer_branch
      %14 = sbr.rel target = $region3
    $region8: #{tpu_custom_call.1} parent=1 // loop_exit
      _
    %778 = vsyncpa [#allocation6], 1
    %s779 = scalar_lea.sflag [#allocation6], 1
    %780 = vsyncpa %s779, 1

</llo_original>
